<compile_context>
chip_gen: v6e
topology: v6e:2x2x1
jax: 0.10.0
libtpu: 0.0.40
codegen_flags: <defaults>
</compile_context>

<pallas_src>
import jax
import jax.numpy as jnp
import numpy as np
from jax.experimental import pallas as pl
from jax.experimental.pallas import tpu as pltpu

LANE = 128
SUBLANE = 8


def _round_up(n, m):
    return ((n + m - 1) // m) * m


def dqn_kernel(x_ref, w1_ref, b1_ref, w2_ref, b2_ref, w3_ref, b3_ref, o_ref):
    # Whole 3-layer MLP on one batch tile. Weights stay VMEM-resident across
    # grid steps (constant-index BlockSpecs). Matmul operands are in the
    # weight dtype (f32 or bf16); accumulation / bias / ReLU are always f32.
    x = x_ref[...].astype(w1_ref.dtype)

    h1 = jnp.dot(x, w1_ref[...], preferred_element_type=jnp.float32) + b1_ref[...]
    h1 = jnp.maximum(h1, 0.0)

    h2 = jnp.dot(h1.astype(w2_ref.dtype), w2_ref[...],
                 preferred_element_type=jnp.float32) + b2_ref[...]
    h2 = jnp.maximum(h2, 0.0)

    out = jnp.dot(h2.astype(w3_ref.dtype), w3_ref[...],
                  preferred_element_type=jnp.float32) + b3_ref[...]
    # Only the real Q-value columns are stored (no 128-wide padded writeback).
    o_ref[...] = out.astype(o_ref.dtype)


def init_dqn_params(key, obs_size, n_actions):
    # Matches DQN.__init__: hidden_size = int(obs_size / 3) * 2 + n_actions
    hidden = int(obs_size / 3) * 2 + n_actions
    sizes = [(obs_size, hidden), (hidden, hidden), (hidden, n_actions)]
    params = []
    for fan_in, fan_out in sizes:
        kw, kb, key = jax.random.split(key, 3)
        # PyTorch nn.Linear default init: U(-1/sqrt(fan_in), 1/sqrt(fan_in)).
        bound = 1.0 / (fan_in ** 0.5)
        # Stored already transposed to [in, out] for x @ W.
        w = jax.random.uniform(kw, (fan_in, fan_out), jnp.float32, -bound, bound)
        b = jax.random.uniform(kb, (1, fan_out), jnp.float32, -bound, bound)
        params += [w, b]
    return params


def pad_params(params):
    """Zero-pad only the hidden feature dim to a LANE multiple (one-time, exact).

    obs (K of the first matmul) and n_actions (output columns) are left
    unpadded: padding obs would only inflate x read traffic and padding
    n_actions would inflate HBM writeback, and the kernel is memory-bound.
    Hidden-dim padding is numerically exact (ReLU(0)=0, zero rows/cols add 0).
    """
    w1, b1, w2, b2, w3, b3 = params
    hid = w1.shape[1]
    dh = _round_up(hid, LANE) - hid
    w1p = jnp.pad(w1, ((0, 0), (0, dh)))
    b1p = jnp.pad(b1, ((0, 0), (0, dh)))
    w2p = jnp.pad(w2, ((0, dh), (0, dh)))
    b2p = jnp.pad(b2, ((0, 0), (0, dh)))
    w3p = jnp.pad(w3, ((0, dh), (0, 0)))
    return (w1p, b1p, w2p, b2p, w3p, b3)


def dqn_forward(x, padded_params, n_actions, *, compute_dtype=jnp.bfloat16,
                max_batch_tile=4096):
    """Run the fused DQN forward.

    compute_dtype=jnp.bfloat16 is the deployment fast path on v5e/v6e/v7x
    (f32 accumulate, so bias/ReLU numerics stay f32); pass jnp.float32 for
    bit-exact parity with the PyTorch `x.float()` forward.
    """
    w1, b1, w2, b2, w3, b3 = padded_params
    batch, obs = x.shape
    assert w3.shape[1] == n_actions

    # Matmul operands in compute dtype; biases stay f32 (f32 accumulator path).
    x = x.astype(compute_dtype)
    w1, w2, w3 = (w.astype(compute_dtype) for w in (w1, w2, w3))

    # Batch tile: sublane-aligned, VMEM-capped, and chosen so any non-trivial
    # batch gives >= 2 grid steps (v7x megacore split + DMA/compute overlap).
    # The grid does NOT have to divide batch: Pallas pads the ragged last
    # tile (inert here, rows never mix), so no wrapper-side jnp.pad of x.
    batch8 = _round_up(batch, SUBLANE)
    tb = min(max_batch_tile, max(SUBLANE, _round_up(pl.cdiv(batch8, 2), SUBLANE)))
    grid = (pl.cdiv(batch, tb),)

    def resident(arr):
        # Full-array block with a constant block index -> stays in VMEM
        # across all grid steps (no per-step re-DMA of the tiny weights).
        return pl.BlockSpec(arr.shape, lambda i: (0,) * arr.ndim)

    out = pl.pallas_call(
        dqn_kernel,
        out_shape=jax.ShapeDtypeStruct((batch, n_actions), jnp.float32),
        grid=grid,
        in_specs=[
            # x tiled over batch. If the x DMA is still exposed after the
            # bf16 / narrow-output changes, pipeline_mode=pl.Buffered(3) here
            # is the next (small) tunable to sweep.
            pl.BlockSpec((tb, obs), lambda i: (i, 0)),
            resident(w1), resident(b1),
            resident(w2), resident(b2),
            resident(w3), resident(b3),
        ],
        out_specs=pl.BlockSpec((tb, n_actions), lambda i: (i, 0)),
        compiler_params=pltpu.CompilerParams(
            dimension_semantics=("parallel",),  # shard batch grid across TCs (v7x)
        ),
    )(x, w1, b1, w2, b2, w3, b3)
    return out


def dqn_reference(x, params):
    w1, b1, w2, b2, w3, b3 = params
    h1 = jnp.maximum(x.astype(jnp.float32) @ w1 + b1, 0.0)
    h2 = jnp.maximum(h1 @ w2 + b2, 0.0)
    return h2 @ w3 + b3


if __name__ == "__main__":
    key = jax.random.PRNGKey(0)
    k_x1, k_x2, k_p = jax.random.split(key, 3)

    obs_size = 48
    n_actions = 4

    params = init_dqn_params(k_p, obs_size, n_actions)
    padded = pad_params(params)

    # 1) f32 path: matches the PyTorch forward (x.float(), f32 Linears).
    x1 = jax.random.normal(k_x1, (8, obs_size), dtype=jnp.float32)
    out1 = dqn_forward(x1, padded, n_actions, compute_dtype=jnp.float32)
    jax.block_until_ready(out1)
    ref1 = dqn_reference(x1, params)
    assert out1.shape == (8, n_actions) and out1.dtype == jnp.float32
    np.testing.assert_allclose(np.asarray(out1), np.asarray(ref1),
                               rtol=1e-5, atol=1e-5)

    # 2) bf16 fast path (deployment default), with a ragged batch that
    #    exercises the partial last grid tile (batch=13, tb=8 -> 2 steps).
    x2 = jax.random.normal(k_x2, (13, obs_size), dtype=jnp.float32)
    out2 = dqn_forward(x2, padded, n_actions, compute_dtype=jnp.bfloat16)
    jax.block_until_ready(out2)
    ref2 = dqn_reference(x2, params)
    assert out2.shape == (13, n_actions) and out2.dtype == jnp.float32
    np.testing.assert_allclose(np.asarray(out2), np.asarray(ref2),
                               rtol=5e-2, atol=5e-2)

    print("KERNEL_OK")
</pallas_src>

<mosaic_0001>
module attributes {stable_mosaic.version = 11 : i64} {
  func.func @dqn_kernel(%arg0: i32, %arg1: memref<8x48xf32, #tpu.memory_space<vmem>>, %arg2: memref<48x128xf32, #tpu.memory_space<vmem>>, %arg3: memref<1x128xf32, #tpu.memory_space<vmem>>, %arg4: memref<128x128xf32, #tpu.memory_space<vmem>>, %arg5: memref<1x128xf32, #tpu.memory_space<vmem>>, %arg6: memref<128x4xf32, #tpu.memory_space<vmem>>, %arg7: memref<1x4xf32, #tpu.memory_space<vmem>>, %arg8: memref<8x4xf32, #tpu.memory_space<vmem>>) attributes {dimension_semantics = [#tpu.dimension_semantics<parallel>], iteration_bounds = array<i64: 1>, scalar_prefetch = 0 : i64, scratch_operands = 0 : i64, tpu.core_type = #tpu.core_type<tc>, window_params = [{transform_indices = @transform_0, window_bounds = array<i64: 8, 48>}, {pipeline_mode = #tpu.pipeline_mode<synchronous>, transform_indices = @transform_1, window_bounds = array<i64: 48, 128>}, {pipeline_mode = #tpu.pipeline_mode<synchronous>, transform_indices = @transform_2, window_bounds = array<i64: 1, 128>}, {pipeline_mode = #tpu.pipeline_mode<synchronous>, transform_indices = @transform_3, window_bounds = array<i64: 128, 128>}, {pipeline_mode = #tpu.pipeline_mode<synchronous>, transform_indices = @transform_4, window_bounds = array<i64: 1, 128>}, {pipeline_mode = #tpu.pipeline_mode<synchronous>, transform_indices = @transform_5, window_bounds = array<i64: 128, 4>}, {pipeline_mode = #tpu.pipeline_mode<synchronous>, transform_indices = @transform_6, window_bounds = array<i64: 1, 4>}, {transform_indices = @transform_7, window_bounds = array<i64: 8, 4>}]} {
    %c0 = arith.constant 0 : index
    %c0_0 = arith.constant 0 : index
    %0 = vector.load %arg1[%c0, %c0_0] : memref<8x48xf32, #tpu.memory_space<vmem>>, vector<8x48xf32>
    %c0_1 = arith.constant 0 : index
    %c0_2 = arith.constant 0 : index
    %1 = vector.load %arg2[%c0_1, %c0_2] : memref<48x128xf32, #tpu.memory_space<vmem>>, vector<48x128xf32>
    %cst = arith.constant dense<0.000000e+00> : vector<8x128xf32>
    %2 = tpu.matmul %0, %1, %cst {dimension_numbers = #tpu.dot_dimension_numbers<[1], [0], [0], [1], [0, 0, 1, 1], [], []>} : vector<8x48xf32>, vector<48x128xf32>, vector<8x128xf32> -> vector<8x128xf32>
    %c0_3 = arith.constant 0 : index
    %c0_4 = arith.constant 0 : index
    %3 = vector.load %arg3[%c0_3, %c0_4] : memref<1x128xf32, #tpu.memory_space<vmem>>, vector<1x128xf32>
    %4 = vector.broadcast %3 : vector<1x128xf32> to vector<8x128xf32>
    %5 = arith.addf %2, %4 : vector<8x128xf32>
    %cst_5 = arith.constant 0.000000e+00 : f32
    %6 = vector.broadcast %cst_5 : f32 to vector<8x128xf32>
    %7 = arith.maximumf %5, %6 : vector<8x128xf32>
    %c0_6 = arith.constant 0 : index
    %c0_7 = arith.constant 0 : index
    %8 = vector.load %arg4[%c0_6, %c0_7] : memref<128x128xf32, #tpu.memory_space<vmem>>, vector<128x128xf32>
    %cst_8 = arith.constant dense<0.000000e+00> : vector<8x128xf32>
    %9 = tpu.matmul %7, %8, %cst_8 {dimension_numbers = #tpu.dot_dimension_numbers<[1], [0], [0], [1], [0, 0, 1, 1], [], []>} : vector<8x128xf32>, vector<128x128xf32>, vector<8x128xf32> -> vector<8x128xf32>
    %c0_9 = arith.constant 0 : index
    %c0_10 = arith.constant 0 : index
    %10 = vector.load %arg5[%c0_9, %c0_10] : memref<1x128xf32, #tpu.memory_space<vmem>>, vector<1x128xf32>
    %11 = vector.broadcast %10 : vector<1x128xf32> to vector<8x128xf32>
    %12 = arith.addf %9, %11 : vector<8x128xf32>
    %cst_11 = arith.constant 0.000000e+00 : f32
    %13 = vector.broadcast %cst_11 : f32 to vector<8x128xf32>
    %14 = arith.maximumf %12, %13 : vector<8x128xf32>
    %c0_12 = arith.constant 0 : index
    %c0_13 = arith.constant 0 : index
    %15 = vector.load %arg6[%c0_12, %c0_13] : memref<128x4xf32, #tpu.memory_space<vmem>>, vector<128x4xf32>
    %cst_14 = arith.constant dense<0.000000e+00> : vector<8x4xf32>
    %16 = tpu.matmul %14, %15, %cst_14 {dimension_numbers = #tpu.dot_dimension_numbers<[1], [0], [0], [1], [0, 0, 1, 1], [], []>} : vector<8x128xf32>, vector<128x4xf32>, vector<8x4xf32> -> vector<8x4xf32>
    %c0_15 = arith.constant 0 : index
    %c0_16 = arith.constant 0 : index
    %17 = vector.load %arg7[%c0_15, %c0_16] : memref<1x4xf32, #tpu.memory_space<vmem>>, vector<1x4xf32>
    %18 = vector.broadcast %17 : vector<1x4xf32> to vector<8x4xf32>
    %19 = arith.addf %16, %18 : vector<8x4xf32>
    %c0_17 = arith.constant 0 : index
    %c0_18 = arith.constant 0 : index
    %20 = vector.load %arg8[%c0_17, %c0_18] : memref<8x4xf32, #tpu.memory_space<vmem>>, vector<8x4xf32>
    tpu.vector_store %arg8[%c0_17, %c0_18], %19 {strides = array<i32>} : memref<8x4xf32, #tpu.memory_space<vmem>>, vector<8x4xf32>,
    return
  }
  func.func @transform_0(%arg0: i32) -> (i32, i32) {
    %c0_i32 = arith.constant 0 : i32
    %c0_i32_0 = arith.constant 0 : i32
    return %arg0, %c0_i32 : i32, i32
  }
  func.func @transform_1(%arg0: i32) -> (i32, i32) {
    %c0_i32 = arith.constant 0 : i32
    %c0_i32_0 = arith.constant 0 : i32
    %c0_i32_1 = arith.constant 0 : i32
    return %c0_i32, %c0_i32_0 : i32, i32
  }
  func.func @transform_2(%arg0: i32) -> (i32, i32) {
    %c0_i32 = arith.constant 0 : i32
    %c0_i32_0 = arith.constant 0 : i32
    %c0_i32_1 = arith.constant 0 : i32
    return %c0_i32, %c0_i32_0 : i32, i32
  }
  func.func @transform_3(%arg0: i32) -> (i32, i32) {
    %c0_i32 = arith.constant 0 : i32
    %c0_i32_0 = arith.constant 0 : i32
    %c0_i32_1 = arith.constant 0 : i32
    return %c0_i32, %c0_i32_0 : i32, i32
  }
  func.func @transform_4(%arg0: i32) -> (i32, i32) {
    %c0_i32 = arith.constant 0 : i32
    %c0_i32_0 = arith.constant 0 : i32
    %c0_i32_1 = arith.constant 0 : i32
    return %c0_i32, %c0_i32_0 : i32, i32
  }
  func.func @transform_5(%arg0: i32) -> (i32, i32) {
    %c0_i32 = arith.constant 0 : i32
    %c0_i32_0 = arith.constant 0 : i32
    %c0_i32_1 = arith.constant 0 : i32
    return %c0_i32, %c0_i32_0 : i32, i32
  }
  func.func @transform_6(%arg0: i32) -> (i32, i32) {
    %c0_i32 = arith.constant 0 : i32
    %c0_i32_0 = arith.constant 0 : i32
    %c0_i32_1 = arith.constant 0 : i32
    return %c0_i32, %c0_i32_0 : i32, i32
  }
  func.func @transform_7(%arg0: i32) -> (i32, i32) {
    %c0_i32 = arith.constant 0 : i32
    %c0_i32_0 = arith.constant 0 : i32
    return %arg0, %c0_i32 : i32, i32
  }
}

</mosaic_0001>

<llo_original>
// kernel: tpu_custom_call.1
$region0: #{tpu_custom_call.1}
  #allocation0 [shape = 'u32[]', space=smem, size = 0x4, offset = 0x4, fixed_abs, tag = 'smem constant byte address 0x4 - core index']
  #allocation1 [shape = 'u32[144,128]{1,0:T(1,128)}', space=vmem, size = 0x12000, scoped, tag = 'internal scratch']
  %s0 = inlined_call_operand.vmem [shape: f32[8,48], index: 0, kind: input, shape index: {}]
  %s1 = inlined_call_operand.hbm [shape: f32[48,128], index: 1, kind: input, shape index: {}]
  %s2 = inlined_call_operand.vmem [shape: f32[1,128], index: 2, kind: input, shape index: {}]
  %s3 = inlined_call_operand.vmem [shape: f32[128,128], index: 3, kind: input, shape index: {}]
  %s4 = inlined_call_operand.hbm [shape: f32[1,128], index: 4, kind: input, shape index: {}]
  %s5 = inlined_call_operand.vmem [shape: f32[128,4], index: 5, kind: input, shape index: {}]
  %s6 = inlined_call_operand.vmem [shape: f32[1,4], index: 6, kind: input, shape index: {}]
  %s7 = inlined_call_operand.vmem [shape: f32[8,4], index: 7, kind: output, shape index: {}]
  %s8 = sld [smem:[#allocation0]]
  $region46: #{tpu_custom_call.1} parent=0
    _
  %s10 = ssub.s32 1, %s8
  %s11 = scalar_select 0, %s10, %s8
  $region1: #{tpu_custom_call.1} parent=0
    #allocation2 [shape = 'u8[24576]{0}', space=vmem, size = 0x6000, scoped, tag = 'input window, operand 1, single buffered']
    #allocation3 [shape = 's32[1]{0}', space=sflag, size = 0x4, scoped, tag = 'scoped memory for tpu_custom_call.1']
    #allocation4 [shape = 'u8[512]{0}', space=vmem, size = 0x400, scoped, tag = 'input window, operand 4, single buffered']
    #allocation5 [shape = 's32[1]{0}', space=sflag, size = 0x4, scoped, tag = 'scoped memory for tpu_custom_call.1']
    %12 = vsyncpa [#allocation3], 0
    %13 = vsyncpa [#allocation5], 0
    // Predicated region
    $region2: #{tpu_custom_call.1} parent=1 // pred_check
      _
    $region3: #{tpu_custom_call.1} parent=1 // pred_check_branch
      %15 = sbr.rel (0) target = $region5
    $region4: #{tpu_custom_call.1} parent=1 // pred_region
      _
    $region5: #{tpu_custom_call.1} parent=1 // pred_fallthru
      _
    // Predicated region
    $region6: #{tpu_custom_call.1} parent=1 // pred_check
      _
    $region7: #{tpu_custom_call.1} parent=1 // pred_check_branch
      %17 = sbr.rel (0) target = $region9
    $region8: #{tpu_custom_call.1} parent=1 // pred_region
      %s19 = ssub.s32 768, 768
      %20 = vsyncadd [#allocation3], %s19
      %s21 = sshll.u32 [#allocation2], 4
      %s22 = int_to_ptr.vmem [resolvable:$true] %s21
      %27 = dma.hbm_to_vmem [thread:$0]  %s1, 768, %s22, [#allocation3], 128, 128, 8
    $region9: #{tpu_custom_call.1} parent=1 // pred_fallthru
      _
    // Predicated region
    $region10: #{tpu_custom_call.1} parent=1 // pred_check
      _
    $region11: #{tpu_custom_call.1} parent=1 // pred_check_branch
      %29 = sbr.rel (0) target = $region13
    $region12: #{tpu_custom_call.1} parent=1 // pred_region
      _
    $region13: #{tpu_custom_call.1} parent=1 // pred_fallthru
      _
    // Predicated region
    $region14: #{tpu_custom_call.1} parent=1 // pred_check
      _
    $region15: #{tpu_custom_call.1} parent=1 // pred_check_branch
      %31 = sbr.rel (0) target = $region17
    $region16: #{tpu_custom_call.1} parent=1 // pred_region
      _
    $region17: #{tpu_custom_call.1} parent=1 // pred_fallthru
      _
    // Predicated region
    $region18: #{tpu_custom_call.1} parent=1 // pred_check
      _
    $region19: #{tpu_custom_call.1} parent=1 // pred_check_branch
      %33 = sbr.rel (0) target = $region21
    $region20: #{tpu_custom_call.1} parent=1 // pred_region
      %s35 = ssub.s32 16, 16
      %36 = vsyncadd [#allocation5], %s35
      %s38 = sshll.u32 [#allocation4], 4
      %s39 = int_to_ptr.vmem [resolvable:$true] %s38
      %41 = dma.hbm_to_vmem [thread:$0]  %s4, 16, %s39, [#allocation5]
    $region21: #{tpu_custom_call.1} parent=1 // pred_fallthru
      _
    // Predicated region
    $region22: #{tpu_custom_call.1} parent=1 // pred_check
      _
    $region23: #{tpu_custom_call.1} parent=1 // pred_check_branch
      %43 = sbr.rel (0) target = $region25
    $region24: #{tpu_custom_call.1} parent=1 // pred_region
      _
    $region25: #{tpu_custom_call.1} parent=1 // pred_fallthru
      _
    // Predicated region
    $region26: #{tpu_custom_call.1} parent=1 // pred_check
      _
    $region27: #{tpu_custom_call.1} parent=1 // pred_check_branch
      %45 = sbr.rel (0) target = $region29
    $region28: #{tpu_custom_call.1} parent=1 // pred_region
      _
    $region29: #{tpu_custom_call.1} parent=1 // pred_fallthru
      _
    // Predicated region
    $region30: #{tpu_custom_call.1} parent=1 // pred_check
      _
    $region31: #{tpu_custom_call.1} parent=1 // pred_check_branch
      %47 = sbr.rel (0) target = $region33
    $region32: #{tpu_custom_call.1} parent=1 // pred_region
      %48 = dma.done [#allocation3], 768
    $region33: #{tpu_custom_call.1} parent=1 // pred_fallthru
      _
    // Predicated region
    $region34: #{tpu_custom_call.1} parent=1 // pred_check
      _
    $region35: #{tpu_custom_call.1} parent=1 // pred_check_branch
      %50 = sbr.rel (0) target = $region37
    $region36: #{tpu_custom_call.1} parent=1 // pred_region
      %51 = dma.done [#allocation5], 16
    $region37: #{tpu_custom_call.1} parent=1 // pred_fallthru
      _
    %v52 = vld [vmem:[%s0] sm:$0xff]
    %v53 = vld [vmem:[#allocation2] sm:$0xff]
    %v54 = vld [vmem:[#allocation2 + $0x8] sm:$0xff]
    %v55 = vld [vmem:[#allocation2 + $0x10] sm:$0xff]
    %v56 = vld [vmem:[#allocation2 + $0x18] sm:$0xff]
    %v57 = vld [vmem:[#allocation2 + $0x20] sm:$0xff]
    %v58 = vld [vmem:[#allocation2 + $0x28] sm:$0xff]
    %v59 = vld [vmem:[%s2] sm:$0x1]
    %v61 = vlaneseq
    %v62 = vshrl.u32 %v61, 7
    %v63 = vsub.s32 0, %v62
    %v64 = vrot.slane %v59, %v63
    %vm66 = vcmask 392192
    %v68 = vsel %vm66, %v52, 0
    %70 = vmatprep.subr.mxu0 0.0
    %71 = vmatpush1.msra.mxu0 0.0
    %72 = vmatprep.subr.mxu0 0.0
    %73 = vmatpush1.msra.mxu0 0.0
    %74 = vmatprep.subr.mxu0 0.0
    %75 = vmatpush1.msra.mxu0 0.0
    %76 = vmatprep.subr.mxu0 0.0
    %77 = vmatpush1.msra.mxu0 0.0
    %78 = vmatprep.subr.mxu0 0.0
    %79 = vmatpush1.msra.mxu0 0.0
    %80 = vmatprep.subr.mxu0 0.0
    %81 = vmatpush1.msra.mxu0 0.0
    %82 = vmatprep.subr.mxu0 0.0
    %83 = vmatpush1.msra.mxu0 0.0
    %84 = vmatprep.subr.mxu0 0.0
    %85 = vmatpush1.msra.mxu0 0.0
    %86 = vmatprep.subr.mxu0 0.0
    %87 = vmatpush1.msra.mxu0 0.0
    %88 = vmatprep.subr.mxu0 0.0
    %89 = vmatpush1.msra.mxu0 0.0
    %90 = vmatprep.subr.mxu0 0.0
    %91 = vmatpush1.msra.mxu0 %v58
    %92 = vmatprep.subr.mxu0 0.0
    %93 = vmatpush1.msra.mxu0 %v57
    %94 = vmatprep.subr.mxu0 0.0
    %95 = vmatpush1.msra.mxu0 %v56
    %96 = vmatprep.subr.mxu0 0.0
    %97 = vmatpush1.msra.mxu0 %v55
    %98 = vmatprep.subr.mxu0 0.0
    %99 = vmatpush1.msra.mxu0 %v54
    %100 = vmatprep.subr.mxu0 0.0
    %101 = vmatpush1.msra.mxu0 %v53
    %102 = vmatprep.subr.mxu0 0.0
    %103 = vmatpush2.msra.mxu0 0.0
    %104 = vmatprep.subr.mxu0 0.0
    %105 = vmatpush2.msra.mxu0 0.0
    %106 = vmatprep.subr.mxu0 0.0
    %107 = vmatpush2.msra.mxu0 0.0
    %108 = vmatprep.subr.mxu0 0.0
    %109 = vmatpush2.msra.mxu0 0.0
    %110 = vmatprep.subr.mxu0 0.0
    %111 = vmatpush2.msra.mxu0 0.0
    %112 = vmatprep.subr.mxu0 0.0
    %113 = vmatpush2.msra.mxu0 0.0
    %114 = vmatprep.subr.mxu0 0.0
    %115 = vmatpush2.msra.mxu0 0.0
    %116 = vmatprep.subr.mxu0 0.0
    %117 = vmatpush2.msra.mxu0 0.0
    %118 = vmatprep.subr.mxu0 0.0
    %119 = vmatpush2.msra.mxu0 0.0
    %120 = vmatprep.subr.mxu0 0.0
    %121 = vmatpush2.msra.mxu0 0.0
    %122 = vmatprep.subr.mxu0 0.0
    %123 = vmatpush2.msra.mxu0 0.0
    %124 = vmatprep.subr.mxu0 0.0
    %125 = vmatpush2.msra.mxu0 0.0
    %126 = vmatprep.subr.mxu0 0.0
    %127 = vmatpush2.msra.mxu0 0.0
    %128 = vmatprep.subr.mxu0 0.0
    %129 = vmatpush2.msra.mxu0 0.0
    %130 = vmatprep.subr.mxu0 0.0
    %131 = vmatpush2.msra.mxu0 0.0
    %132 = vmatprep.subr.mxu0 0.0
    %133 = vmatpush2.msra.mxu0 0.0
    %134 = vmatprep.mubr.f32.mxu0 0.0
    %135 = vmatmul.mubr.f32.gmra.mxu0 %v68
    %v136 = vpop.f32.mrf.mxu0
    %v137 = vadd.f32 %v64, %v136
    %v138 = vpop.f32.mrf.mxu0
    %139 = vdwg.mxu0
    %v140 = vmax.f32 %v137, 0.0
    %v141 = vld [vmem:[%s3] sm:$0xff]
    %v142 = vld [vmem:[%s3 + $0x8] sm:$0xff]
    %v143 = vld [vmem:[%s3 + $0x10] sm:$0xff]
    %v144 = vld [vmem:[%s3 + $0x18] sm:$0xff]
    %v145 = vld [vmem:[%s3 + $0x20] sm:$0xff]
    %v146 = vld [vmem:[%s3 + $0x28] sm:$0xff]
    %v147 = vld [vmem:[%s3 + $0x30] sm:$0xff]
    %v148 = vld [vmem:[%s3 + $0x38] sm:$0xff]
    %v149 = vld [vmem:[%s3 + $0x40] sm:$0xff]
    %v150 = vld [vmem:[%s3 + $0x48] sm:$0xff]
    %v151 = vld [vmem:[%s3 + $0x50] sm:$0xff]
    %v152 = vld [vmem:[%s3 + $0x58] sm:$0xff]
    %v153 = vld [vmem:[%s3 + $0x60] sm:$0xff]
    %v154 = vld [vmem:[%s3 + $0x68] sm:$0xff]
    %v155 = vld [vmem:[%s3 + $0x70] sm:$0xff]
    %v156 = vld [vmem:[%s3 + $0x78] sm:$0xff]
    %v157 = vld [vmem:[#allocation4] sm:$0x1]
    %v159 = vlaneseq
    %v160 = vshrl.u32 %v159, 7
    %v161 = vsub.s32 0, %v160
    %v162 = vrot.slane %v157, %v161
    %164 = vmatprep.subr.mxu0 0.0
    %165 = vmatpush1.msra.mxu0 %v156
    %166 = vmatprep.subr.mxu0 0.0
    %167 = vmatpush1.msra.mxu0 %v155
    %168 = vmatprep.subr.mxu0 0.0
    %169 = vmatpush1.msra.mxu0 %v154
    %170 = vmatprep.subr.mxu0 0.0
    %171 = vmatpush1.msra.mxu0 %v153
    %172 = vmatprep.subr.mxu0 0.0
    %173 = vmatpush1.msra.mxu0 %v152
    %174 = vmatprep.subr.mxu0 0.0
    %175 = vmatpush1.msra.mxu0 %v151
    %176 = vmatprep.subr.mxu0 0.0
    %177 = vmatpush1.msra.mxu0 %v150
    %178 = vmatprep.subr.mxu0 0.0
    %179 = vmatpush1.msra.mxu0 %v149
    %180 = vmatprep.subr.mxu0 0.0
    %181 = vmatpush1.msra.mxu0 %v148
    %182 = vmatprep.subr.mxu0 0.0
    %183 = vmatpush1.msra.mxu0 %v147
    %184 = vmatprep.subr.mxu0 0.0
    %185 = vmatpush1.msra.mxu0 %v146
    %186 = vmatprep.subr.mxu0 0.0
    %187 = vmatpush1.msra.mxu0 %v145
    %188 = vmatprep.subr.mxu0 0.0
    %189 = vmatpush1.msra.mxu0 %v144
    %190 = vmatprep.subr.mxu0 0.0
    %191 = vmatpush1.msra.mxu0 %v143
    %192 = vmatprep.subr.mxu0 0.0
    %193 = vmatpush1.msra.mxu0 %v142
    %194 = vmatprep.subr.mxu0 0.0
    %195 = vmatpush1.msra.mxu0 %v141
    %196 = vmatprep.subr.mxu0 0.0
    %197 = vmatpush2.msra.mxu0 0.0
    %198 = vmatprep.subr.mxu0 0.0
    %199 = vmatpush2.msra.mxu0 0.0
    %200 = vmatprep.subr.mxu0 0.0
    %201 = vmatpush2.msra.mxu0 0.0
    %202 = vmatprep.subr.mxu0 0.0
    %203 = vmatpush2.msra.mxu0 0.0
    %204 = vmatprep.subr.mxu0 0.0
    %205 = vmatpush2.msra.mxu0 0.0
    %206 = vmatprep.subr.mxu0 0.0
    %207 = vmatpush2.msra.mxu0 0.0
    %208 = vmatprep.subr.mxu0 0.0
    %209 = vmatpush2.msra.mxu0 0.0
    %210 = vmatprep.subr.mxu0 0.0
    %211 = vmatpush2.msra.mxu0 0.0
    %212 = vmatprep.subr.mxu0 0.0
    %213 = vmatpush2.msra.mxu0 0.0
    %214 = vmatprep.subr.mxu0 0.0
    %215 = vmatpush2.msra.mxu0 0.0
    %216 = vmatprep.subr.mxu0 0.0
    %217 = vmatpush2.msra.mxu0 0.0
    %218 = vmatprep.subr.mxu0 0.0
    %219 = vmatpush2.msra.mxu0 0.0
    %220 = vmatprep.subr.mxu0 0.0
    %221 = vmatpush2.msra.mxu0 0.0
    %222 = vmatprep.subr.mxu0 0.0
    %223 = vmatpush2.msra.mxu0 0.0
    %224 = vmatprep.subr.mxu0 0.0
    %225 = vmatpush2.msra.mxu0 0.0
    %226 = vmatprep.subr.mxu0 0.0
    %227 = vmatpush2.msra.mxu0 0.0
    %228 = vmatprep.mubr.f32.mxu0 0.0
    %229 = vmatmul.mubr.f32.gmra.mxu0 %v140
    %v230 = vpop.f32.mrf.mxu0
    %v231 = vadd.f32 %v162, %v230
    %v232 = vpop.f32.mrf.mxu0
    %233 = vdwg.mxu0
    %v234 = vmax.f32 %v231, 0.0
    %v235 = vld [vmem:[%s5] sm:$0xff]
    %v236 = vld [vmem:[%s5 + $0x8] sm:$0xff]
    %v237 = vld [vmem:[%s5 + $0x10] sm:$0xff]
    %v238 = vld [vmem:[%s5 + $0x18] sm:$0xff]
    %v239 = vld [vmem:[%s5 + $0x20] sm:$0xff]
    %v240 = vld [vmem:[%s5 + $0x28] sm:$0xff]
    %v241 = vld [vmem:[%s5 + $0x30] sm:$0xff]
    %v242 = vld [vmem:[%s5 + $0x38] sm:$0xff]
    %v243 = vld [vmem:[%s5 + $0x40] sm:$0xff]
    %v244 = vld [vmem:[%s5 + $0x48] sm:$0xff]
    %v245 = vld [vmem:[%s5 + $0x50] sm:$0xff]
    %v246 = vld [vmem:[%s5 + $0x58] sm:$0xff]
    %v247 = vld [vmem:[%s5 + $0x60] sm:$0xff]
    %v248 = vld [vmem:[%s5 + $0x68] sm:$0xff]
    %v249 = vld [vmem:[%s5 + $0x70] sm:$0xff]
    %v250 = vld [vmem:[%s5 + $0x78] sm:$0xff]
    %v251 = vld [vmem:[%s6] sm:$0x1]
    %v253 = vlaneseq
    %v254 = vshrl.u32 %v253, 7
    %v255 = vsub.s32 0, %v254
    %v256 = vrot.slane %v251, %v255
    %258 = vmatprep.subr.mxu0 0.0
    %259 = vmatpush1.msra.mxu0 %v250
    %260 = vmatprep.subr.mxu0 0.0
    %261 = vmatpush1.msra.mxu0 %v249
    %262 = vmatprep.subr.mxu0 0.0
    %263 = vmatpush1.msra.mxu0 %v248
    %264 = vmatprep.subr.mxu0 0.0
    %265 = vmatpush1.msra.mxu0 %v247
    %266 = vmatprep.subr.mxu0 0.0
    %267 = vmatpush1.msra.mxu0 %v246
    %268 = vmatprep.subr.mxu0 0.0
    %269 = vmatpush1.msra.mxu0 %v245
    %270 = vmatprep.subr.mxu0 0.0
    %271 = vmatpush1.msra.mxu0 %v244
    %272 = vmatprep.subr.mxu0 0.0
    %273 = vmatpush1.msra.mxu0 %v243
    %274 = vmatprep.subr.mxu0 0.0
    %275 = vmatpush1.msra.mxu0 %v242
    %276 = vmatprep.subr.mxu0 0.0
    %277 = vmatpush1.msra.mxu0 %v241
    %278 = vmatprep.subr.mxu0 0.0
    %279 = vmatpush1.msra.mxu0 %v240
    %280 = vmatprep.subr.mxu0 0.0
    %281 = vmatpush1.msra.mxu0 %v239
    %282 = vmatprep.subr.mxu0 0.0
    %283 = vmatpush1.msra.mxu0 %v238
    %284 = vmatprep.subr.mxu0 0.0
    %285 = vmatpush1.msra.mxu0 %v237
    %286 = vmatprep.subr.mxu0 0.0
    %287 = vmatpush1.msra.mxu0 %v236
    %288 = vmatprep.subr.mxu0 0.0
    %289 = vmatpush1.msra.mxu0 %v235
    %290 = vmatprep.subr.mxu0 0.0
    %291 = vmatpush2.msra.mxu0 0.0
    %292 = vmatprep.subr.mxu0 0.0
    %293 = vmatpush2.msra.mxu0 0.0
    %294 = vmatprep.subr.mxu0 0.0
    %295 = vmatpush2.msra.mxu0 0.0
    %296 = vmatprep.subr.mxu0 0.0
    %297 = vmatpush2.msra.mxu0 0.0
    %298 = vmatprep.subr.mxu0 0.0
    %299 = vmatpush2.msra.mxu0 0.0
    %300 = vmatprep.subr.mxu0 0.0
    %301 = vmatpush2.msra.mxu0 0.0
    %302 = vmatprep.subr.mxu0 0.0
    %303 = vmatpush2.msra.mxu0 0.0
    %304 = vmatprep.subr.mxu0 0.0
    %305 = vmatpush2.msra.mxu0 0.0
    %306 = vmatprep.subr.mxu0 0.0
    %307 = vmatpush2.msra.mxu0 0.0
    %308 = vmatprep.subr.mxu0 0.0
    %309 = vmatpush2.msra.mxu0 0.0
    %310 = vmatprep.subr.mxu0 0.0
    %311 = vmatpush2.msra.mxu0 0.0
    %312 = vmatprep.subr.mxu0 0.0
    %313 = vmatpush2.msra.mxu0 0.0
    %314 = vmatprep.subr.mxu0 0.0
    %315 = vmatpush2.msra.mxu0 0.0
    %316 = vmatprep.subr.mxu0 0.0
    %317 = vmatpush2.msra.mxu0 0.0
    %318 = vmatprep.subr.mxu0 0.0
    %319 = vmatpush2.msra.mxu0 0.0
    %320 = vmatprep.subr.mxu0 0.0
    %321 = vmatpush2.msra.mxu0 0.0
    %322 = vmatprep.mubr.f32.mxu0 0.0
    %323 = vmatmul.mubr.f32.gmra.mxu0 %v234
    %v324 = vpop.f32.mrf.mxu0
    %v325 = vadd.f32 %v256, %v324
    %v326 = vpop.f32.mrf.mxu0
    %327 = vdwg.mxu0
    %vm328 = vcmask 31744
    %329 = vst.msk [vmem:[%s7] sm:$0xff] %vm328, %v325
    // Predicated region
    $region38: #{tpu_custom_call.1} parent=1 // pred_check
      _
    $region39: #{tpu_custom_call.1} parent=1 // pred_check_branch
      %331 = sbr.rel (0) target = $region41
    $region40: #{tpu_custom_call.1} parent=1 // pred_region
      _
    $region41: #{tpu_custom_call.1} parent=1 // pred_fallthru
      _
    // Predicated region
    $region42: #{tpu_custom_call.1} parent=1 // pred_check
      _
    $region43: #{tpu_custom_call.1} parent=1 // pred_check_branch
      %333 = sbr.rel (0) target = $region45
    $region44: #{tpu_custom_call.1} parent=1 // pred_region
      _
    $region45: #{tpu_custom_call.1} parent=1 // pred_fallthru
      _
    %334 = vsyncpa [#allocation3], 1
    %335 = vsyncpa [#allocation5], 1

</llo_original>
